<compile_context>
chip_gen: v6e
topology: v6e:2x2x1
jax: 0.10.0
libtpu: 0.0.40
codegen_flags: <defaults>
</compile_context>

<pallas_src>
import functools

import numpy as np
import jax
import jax.numpy as jnp
from jax import lax
from jax.experimental import pallas as pl
from jax.experimental.pallas import tpu as pltpu


# ----------------------------------------------------------------------------
# helpers
# ----------------------------------------------------------------------------
def _round_up(x, m):
    return ((x + m - 1) // m) * m


def _pick_vmem_limit_bytes():
    """Per-generation scoped-VMEM budget: ~100 MiB on 128-MiB chips (v5e/v6e),
    48 MiB on v7x (64 MiB physical); safe fallback if the query fails."""
    try:
        cap = int(pltpu.get_tpu_info().vmem_capacity_bytes)
        return max(32 << 20, min(cap - (16 << 20), 100 << 20))
    except Exception:
        return 48 << 20


def _detect_num_tensorcores():
    """Best-effort TensorCore count (2 on v7x, 1 on v5e/v6e). Falls back to 1."""
    try:
        info = pltpu.get_tpu_info()
        for attr in ("num_cores", "core_count", "tensorcores_per_chip",
                     "num_tensorcores", "cores_per_chip"):
            v = getattr(info, attr, None)
            if v:
                return int(v)
    except Exception:
        pass
    return 1


def _activation(pre, nonlinearity):
    if nonlinearity == 'tanh':
        return jnp.tanh(pre)
    elif nonlinearity == 'relu':
        return jnp.maximum(pre, 0.0)
    elif nonlinearity == 'id':
        return pre
    elif nonlinearity == 'leakyrelu':
        return jnp.where(pre >= 0.0, pre, 0.01 * pre)
    else:
        raise ValueError(f"Unknown nonlinearity '{nonlinearity}'")


# ----------------------------------------------------------------------------
# Row-tiled linear kernel: y = x @ W^T + b.  Weight/bias are whole-array
# resident in VMEM (single copy); x is streamed by row tiles.
# ----------------------------------------------------------------------------
def _linear_kernel(x_ref, wT_ref, b_ref, o_ref):
    x = x_ref[...].astype(wT_ref.dtype)
    acc = jnp.dot(x, wT_ref[...], preferred_element_type=jnp.float32)
    o_ref[...] = (acc + b_ref[...]).astype(o_ref.dtype)


def linear_rows(x2d, wT, bias_row, *, out_dtype=jnp.float32, row_tile=512,
                vmem_limit_bytes=None):
    """x2d: (N, F);  wT: (F, O_pad) (pre-padded / pre-cast, cached);
    bias_row: (1, O_pad) f32.  Returns (N, O_pad) of out_dtype."""
    N, F = x2d.shape
    Fw, O_pad = wT.shape
    assert Fw == F
    if vmem_limit_bytes is None:
        vmem_limit_bytes = _pick_vmem_limit_bytes()

    rn = min(row_tile, _round_up(N, 8))           # sublane-aligned row tile
    n_pad = _round_up(N, rn)
    if n_pad != N:
        x2d = jnp.pad(x2d, ((0, n_pad - N), (0, 0)))

    y = pl.pallas_call(
        _linear_kernel,
        out_shape=jax.ShapeDtypeStruct((n_pad, O_pad), out_dtype),
        grid_spec=pltpu.PrefetchScalarGridSpec(
            num_scalar_prefetch=0,
            grid=(n_pad // rn,),
            in_specs=[
                pl.BlockSpec((rn, F), lambda i: (i, 0)),               # x row tile
                pl.BlockSpec(memory_space=pltpu.MemorySpace.VMEM),     # W^T resident
                pl.BlockSpec(memory_space=pltpu.MemorySpace.VMEM),     # bias row
            ],
            out_specs=pl.BlockSpec((rn, O_pad), lambda i: (i, 0)),
        ),
        compiler_params=pltpu.CompilerParams(
            dimension_semantics=("parallel",),
            vmem_limit_bytes=vmem_limit_bytes),
    )(x2d, wT, bias_row)
    return y[:N]


# ----------------------------------------------------------------------------
# Reservoir recurrence kernel: grid = (batch tiles [parallel], time chunks
# [arbitrary]).  Hidden state carried in VMEM scratch (f32) across time chunks;
# each grid step runs `time_chunk` serial steps (unroll capped at 8).  The input
# projection u_t = x_t @ W_ih^T + b_ih is precomputed (bf16), so each serial
# step is a single bf16 (B_tile, H) @ (H, H) matmul plus the f32 leaky blend.
# Padded timesteps (t >= seq_len) keep the state frozen, so the f32 h_last
# output is exactly h(T-1).
# ----------------------------------------------------------------------------
def _reservoir_kernel(u_ref, whhT_ref, h0_ref, out_ref, hlast_ref, h_scr, *,
                      leaking_rate, nonlinearity, time_chunk, seq_len, unroll):
    t_chunk = pl.program_id(1)

    @pl.when(t_chunk == 0)
    def _():
        h_scr[...] = h0_ref[...]

    alpha = leaking_rate
    w = whhT_ref[...]                                 # (H_pad, H_pad) bf16, resident
    t0 = t_chunk * time_chunk

    def step(i, h):
        pre = u_ref[i].astype(jnp.float32) + jnp.dot(
            h.astype(w.dtype), w, preferred_element_type=jnp.float32)
        act = _activation(pre, nonlinearity)
        h_new = (1.0 - alpha) * h + alpha * act        # f32 blend
        # freeze state on padded timesteps so h_last == h(seq_len - 1) exactly
        h_new = jnp.where(t0 + i < seq_len, h_new, h)
        out_ref[i] = h_new.astype(out_ref.dtype)
        return h_new

    h_final = lax.fori_loop(0, time_chunk, step, h_scr[...], unroll=unroll)
    h_scr[...] = h_final
    hlast_ref[...] = h_final                           # f32 final state (last write wins)


def reservoir_recurrence(u_seq, whhT, h0_pad, *, leaking_rate, nonlinearity,
                         seq_len, time_chunk, batch_tile, vmem_limit_bytes,
                         out_dtype=jnp.bfloat16):
    """u_seq: (T_pad, B_pad, H_pad) bf16 pre-projected inputs (bias folded in);
    whhT: (H_pad, H_pad) bf16 (cached); h0_pad: (B_pad, H_pad) f32.
    Returns (out (T_pad, B_pad, H_pad) bf16, h_last (B_pad, H_pad) f32)."""
    T_pad, B_pad, H_pad = u_seq.shape
    assert T_pad % time_chunk == 0 and B_pad % batch_tile == 0
    unroll = max(1, min(8, time_chunk))

    kernel = functools.partial(
        _reservoir_kernel, leaking_rate=float(leaking_rate),
        nonlinearity=nonlinearity, time_chunk=time_chunk,
        seq_len=int(seq_len), unroll=unroll)

    out, h_last = pl.pallas_call(
        kernel,
        out_shape=(jax.ShapeDtypeStruct((T_pad, B_pad, H_pad), out_dtype),
                   jax.ShapeDtypeStruct((B_pad, H_pad), jnp.float32)),
        grid_spec=pltpu.PrefetchScalarGridSpec(
            num_scalar_prefetch=0,
            grid=(B_pad // batch_tile, T_pad // time_chunk),
            in_specs=[
                # pipelined, time-chunked, batch-tiled pre-projected inputs (bf16)
                pl.BlockSpec((time_chunk, batch_tile, H_pad),
                             lambda b, t: (t, b, 0)),
                # grid-invariant recurrent weight: whole-array resident in VMEM
                pl.BlockSpec(memory_space=pltpu.MemorySpace.VMEM),
                # h0: one block per batch tile, reused across time chunks
                pl.BlockSpec((batch_tile, H_pad), lambda b, t: (b, 0)),
            ],
            out_specs=(
                pl.BlockSpec((time_chunk, batch_tile, H_pad),
                             lambda b, t: (t, b, 0)),
                pl.BlockSpec((batch_tile, H_pad), lambda b, t: (b, 0)),
            ),
            scratch_shapes=[pltpu.VMEM((batch_tile, H_pad), jnp.float32)],
        ),
        compiler_params=pltpu.CompilerParams(
            # TODO(synk): switch the batch axis to pltpu.CORE_PARALLEL on v7x once
            # core-count detection is reliable in this environment.
            dimension_semantics=("parallel", "arbitrary"),
            vmem_limit_bytes=vmem_limit_bytes),
    )(u_seq, whhT, h0_pad)
    return out, h_last


# ----------------------------------------------------------------------------
# time_chunk / batch_tile pickers (VMEM- and TensorCore-aware)
# ----------------------------------------------------------------------------
def _pick_batch_tile(B_pad, num_cores):
    if num_cores > 1 and B_pad % (num_cores * 16) == 0:
        return B_pad // num_cores
    return B_pad


def _auto_time_chunk(T, batch_tile, H_pad, vmem_limit_bytes):
    # resident: whhT (bf16) + h0/h_last blocks + scratch (f32)
    resident = 2 * H_pad * H_pad + 5 * batch_tile * H_pad * 4
    stream_budget = max(vmem_limit_bytes // 2 - resident, 1 << 20)
    # streamed per chunk step: (u in + h out) x double-buffer x bf16
    per_tt = 2 * 2 * batch_tile * H_pad * 2
    tt = int(stream_budget // per_tt)
    tt = max(8, min(tt, 128))
    tt = min(tt, _round_up(T, 8))       # do not over-pad short sequences
    tt = max(8, (tt // 8) * 8)
    return tt


# ----------------------------------------------------------------------------
# Washout applied AFTER the readout (affine readout commutes with the per-batch
# time shift).  Washed-out tail rows are filled with the readout bias, which is
# exactly what torchesn produces (readout of the zero-padded reservoir rows).
# `washout` is a host-side integer array (static).
# ----------------------------------------------------------------------------
def washout_after_readout(y_full, washout, seq_len, bias):
    T, B, O = y_full.shape
    w_np = np.asarray(washout).astype(np.int64)
    new_lens = [int(seq_len) - int(v) for v in w_np]
    max_len = max(new_lens)
    w = jnp.asarray(w_np, dtype=jnp.int32)                       # (B,)
    t_idx = jnp.arange(max_len, dtype=jnp.int32)[:, None]        # (max_len, 1)
    src = t_idx + w[None, :]                                     # (max_len, B)
    valid = src < T
    src = jnp.minimum(src, T - 1)
    gathered = jnp.take_along_axis(y_full, src[:, :, None], axis=0)
    filled = jnp.where(valid[:, :, None], gathered, bias[None, None, :])
    return filled, new_lens


# torchesn-semantics washout on the reservoir output (used by the reference).
def washout_tensor(output, washout, seq_len):
    T, B, F = output.shape
    w_np = np.asarray(washout).astype(np.int64)
    new_lens = [int(seq_len) - int(v) for v in w_np]
    max_len = max(new_lens)
    w = jnp.asarray(w_np, dtype=jnp.int32)
    t_idx = jnp.arange(max_len, dtype=jnp.int32)[:, None]
    src = t_idx + w[None, :]
    valid = src < T
    src = jnp.minimum(src, T - 1)
    gathered = jnp.take_along_axis(output, src[:, :, None], axis=0)
    washed = jnp.where(valid[:, :, None], gathered, 0.0)
    return washed, new_lens


# ----------------------------------------------------------------------------
# Host-side glue: parameter init (incl. spectral-radius scaling), full forward
# (mirrors ESN.forward for non-packed input with readout_training='gd' / no target).
# ----------------------------------------------------------------------------
class ESNPallas:
    def __init__(self, input_size, hidden_size, output_size, num_layers=1,
                 nonlinearity='tanh', leaking_rate=1.0, spectral_radius=0.9,
                 w_ih_scale=1.0, density=1.0, time_chunk=None, key=None):
        self.input_size = input_size
        self.hidden_size = hidden_size
        self.output_size = output_size
        self.num_layers = num_layers
        self.nonlinearity = nonlinearity
        self.leaking_rate = float(leaking_rate)
        self.spectral_radius = spectral_radius
        self.time_chunk = time_chunk            # None -> derived from VMEM budget
        self._vmem_limit = _pick_vmem_limit_bytes()
        self._num_cores = _detect_num_tensorcores()
        if key is None:
            key = jax.random.PRNGKey(0)

        H = hidden_size
        self.H_pad = _round_up(H, 128)           # lane-align hidden width
        self.O_pad = _round_up(output_size, 128)

        w_ih_scale_vec = np.ones(input_size + 1, np.float32) * w_ih_scale

        self.w_ih, self.b_ih, self.w_hh = [], [], []
        for l in range(num_layers):
            in_l = input_size if l == 0 else hidden_size
            key, k1, k2, k3, k4 = jax.random.split(key, 5)
            w_ih = jax.random.uniform(k1, (hidden_size, in_l), jnp.float32, -1.0, 1.0)
            if l == 0:
                w_ih = w_ih * jnp.asarray(w_ih_scale_vec[1:])[None, :]
            b_ih = (jax.random.uniform(k2, (hidden_size,), jnp.float32, -1.0, 1.0)
                    * w_ih_scale_vec[0])
            w_hh = jax.random.uniform(k3, (hidden_size, hidden_size),
                                      jnp.float32, -1.0, 1.0)
            if density < 1.0:
                mask = jax.random.bernoulli(k4, density, (hidden_size, hidden_size))
                w_hh = jnp.where(mask, w_hh, 0.0)
            # spectral radius scaling (host-side numpy eig — general eig is not a TPU op)
            abs_eigs = np.abs(np.linalg.eigvals(np.asarray(w_hh)))
            w_hh = w_hh * (spectral_radius / float(np.max(abs_eigs)))
            self.w_ih.append(w_ih)
            self.b_ih.append(b_ih)
            self.w_hh.append(w_hh)

        # readout: nn.Linear(hidden_size * num_layers, output_size)   (w_io=False)
        fan_in = hidden_size * num_layers
        bound = 1.0 / np.sqrt(fan_in)
        key, k5, k6 = jax.random.split(key, 3)
        self.w_out = jax.random.uniform(k5, (output_size, fan_in), jnp.float32,
                                        -bound, bound)
        self.b_out = jax.random.uniform(k6, (output_size,), jnp.float32,
                                        -bound, bound)

        # ---- cached padded / transposed / bf16-cast kernel operands ----
        self._whhT, self._wihT, self._bih_row = [], [], []
        for l in range(num_layers):
            whhT = jnp.zeros((self.H_pad, self.H_pad), jnp.bfloat16)
            whhT = whhT.at[:H, :H].set(self.w_hh[l].T.astype(jnp.bfloat16))
            self._whhT.append(whhT)
            F_l = input_size if l == 0 else self.H_pad
            Fw = self.w_ih[l].shape[1]
            wihT = jnp.zeros((F_l, self.H_pad), jnp.bfloat16)
            wihT = wihT.at[:Fw, :H].set(self.w_ih[l].T.astype(jnp.bfloat16))
            self._wihT.append(wihT)
            brow = jnp.zeros((1, self.H_pad), jnp.float32).at[0, :H].set(
                self.b_ih[l].astype(jnp.float32))
            self._bih_row.append(brow)
        self._woutT = jnp.zeros((fan_in, self.O_pad), jnp.bfloat16).at[:, :output_size].set(
            self.w_out.T.astype(jnp.bfloat16))
        self._bout_row = jnp.zeros((1, self.O_pad), jnp.float32).at[0, :output_size].set(
            self.b_out.astype(jnp.float32))

    def forward(self, inp, washout, h_0=None):
        """inp: (T, B, input_size); washout: host int array (B,) (static);
        h_0: (num_layers, B, H) or None.  Returns (output, h_n)."""
        T, B, F_in = inp.shape
        H, L, O = self.hidden_size, self.num_layers, self.output_size
        H_pad = self.H_pad
        B_pad = _round_up(B, 16)      # sublane-align batch (bf16-friendly)

        batch_tile = _pick_batch_tile(B_pad, self._num_cores)
        TT = self.time_chunk or _auto_time_chunk(T, batch_tile, H_pad,
                                                 self._vmem_limit)
        T_pad = _round_up(T, TT)

        if h_0 is None:
            h_0 = jnp.zeros((L, B, H), jnp.float32)
        h0_pad = jnp.zeros((L, B_pad, H_pad), jnp.float32).at[:, :B, :H].set(
            h_0.astype(jnp.float32))
        x_pad = jnp.zeros((T_pad, B_pad, F_in), jnp.float32).at[:T, :B, :].set(
            inp.astype(jnp.float32))

        # ---- reservoir (DeepESN stacking); padded hidden lanes stay identically 0 ----
        layer_in = x_pad                             # (T_pad, B_pad, F_l)
        layer_outs, h_finals = [], []
        for l in range(L):
            Fl = layer_in.shape[-1]
            # Hoisted input projection + bias: one batched bf16 matmul over all
            # timesteps, removed from the serial critical path; stored in bf16.
            u_flat = linear_rows(layer_in.reshape(T_pad * B_pad, Fl),
                                 self._wihT[l], self._bih_row[l],
                                 out_dtype=jnp.bfloat16,
                                 vmem_limit_bytes=self._vmem_limit)
            u_seq = u_flat.reshape(T_pad, B_pad, H_pad)
            out_l, h_last = reservoir_recurrence(
                u_seq, self._whhT[l], h0_pad[l],
                leaking_rate=self.leaking_rate, nonlinearity=self.nonlinearity,
                seq_len=T, time_chunk=TT, batch_tile=batch_tile,
                vmem_limit_bytes=self._vmem_limit)
            layer_outs.append(out_l[:T, :B, :H])
            h_finals.append(h_last[:B, :H])           # exact f32 h(T-1)
            layer_in = out_l                          # keep padded bf16 layout
            # TODO(synk): fuse the next layer's input projection into the
            # reservoir kernel's per-chunk epilogue to save one HBM pass.

        res_out = jnp.concatenate(layer_outs, axis=-1)      # (T, B, H*L) bf16
        hidden = jnp.stack(h_finals, axis=0)                # (L, B, H) f32

        # ---- readout first (row-tiled Pallas matmul, bf16 weights / f32 acc) ----
        y_pad = linear_rows(res_out.reshape(T * B, H * L),
                            self._woutT, self._bout_row,
                            out_dtype=jnp.float32,
                            vmem_limit_bytes=self._vmem_limit)
        y_full = y_pad[:, :O].reshape(T, B, O)

        # ---- washout applied on the small (T, B, O) readout output ----
        y, _seq_lengths = washout_after_readout(y_full, washout, T, self.b_out)
        # TODO(synk): offline readout training ('svd'/'cholesky'/'inv' ridge
        # regression), w_io=True and PackedSequence handling are not implemented
        # (inference / 'gd' readout path only).
        return y, hidden


# ----------------------------------------------------------------------------
# Pure-JAX reference (precision-matched: bf16 weights + bf16 u/output storage,
# f32 state carry and accumulation; torchesn order: washout then readout).
# ----------------------------------------------------------------------------
def _reference_forward(esn, inp, washout, h_0):
    bf16 = jnp.bfloat16
    T, B, _ = inp.shape
    H, L = esn.hidden_size, esn.num_layers
    a = esn.leaking_rate
    layer_in = inp.astype(jnp.float32)
    outs, finals = [], []
    for l in range(L):
        w_ih = esn.w_ih[l].astype(bf16)
        w_hh = esn.w_hh[l].astype(bf16)
        u = jnp.einsum('tbf,hf->tbh', layer_in.astype(bf16), w_ih,
                       preferred_element_type=jnp.float32) + esn.b_ih[l]
        u = u.astype(bf16).astype(jnp.float32)       # u is stored in bf16 on the fast path
        h = h_0[l].astype(jnp.float32)
        hs = []
        for t in range(T):
            pre = u[t] + jnp.dot(h.astype(bf16), w_hh.T,
                                 preferred_element_type=jnp.float32)
            h = (1.0 - a) * h + a * _activation(pre, esn.nonlinearity)
            hs.append(h)
        out = jnp.stack(hs, axis=0)
        outs.append(out)
        finals.append(h)
        layer_in = out
    res = jnp.concatenate(outs, axis=-1)
    res, _ = washout_tensor(res, washout, T)
    y = jnp.dot(res.astype(bf16), esn.w_out.T.astype(bf16),
                preferred_element_type=jnp.float32) + esn.b_out
    return y, jnp.stack(finals, axis=0)


if __name__ == "__main__":
    key = jax.random.PRNGKey(0)
    k_in, k_h0, k_model = jax.random.split(key, 3)

    seq_len, batch = 8, 2
    input_size, hidden_size, output_size, num_layers = 4, 32, 3, 2

    x = jax.random.normal(k_in, (seq_len, batch, input_size), jnp.float32)
    h0 = jax.random.normal(k_h0, (num_layers, batch, hidden_size), jnp.float32) * 0.1
    washout = np.array([1, 2], dtype=np.int32)

    esn = ESNPallas(input_size, hidden_size, output_size, num_layers=num_layers,
                    nonlinearity='tanh', leaking_rate=0.9, spectral_radius=0.9,
                    w_ih_scale=1.0, density=1.0, key=k_model)

    output, h_n = esn.forward(x, washout, h0)
    jax.block_until_ready((output, h_n))

    assert output.shape == (seq_len - int(washout.min()), batch, output_size)
    assert h_n.shape == (num_layers, batch, hidden_size)

    # numerical check against a precision-matched pure-JAX reference
    y_ref, h_ref = _reference_forward(esn, x, washout, h0)
    np.testing.assert_allclose(np.asarray(output), np.asarray(y_ref),
                               rtol=2e-2, atol=2e-2)
    np.testing.assert_allclose(np.asarray(h_n), np.asarray(h_ref),
                               rtol=2e-2, atol=2e-2)

    print("KERNEL_OK")
</pallas_src>

<mosaic_0001>
module attributes {stable_mosaic.version = 11 : i64} {
  func.func @_linear_kernel(%arg0: i32, %arg1: memref<128x4xf32, #tpu.memory_space<vmem>>, %arg2: memref<4x128xbf16, #tpu.memory_space<vmem>>, %arg3: memref<1x128xf32, #tpu.memory_space<vmem>>, %arg4: memref<128x128xbf16, #tpu.memory_space<vmem>>) attributes {dimension_semantics = [#tpu.dimension_semantics<parallel>], iteration_bounds = array<i64: 1>, scalar_prefetch = 0 : i64, scratch_operands = 0 : i64, tpu.core_type = #tpu.core_type<tc>, window_params = [{transform_indices = @transform_0, window_bounds = array<i64: 128, 4>}, {pipeline_mode = #tpu.pipeline_mode<synchronous>, transform_indices = @transform_1, window_bounds = array<i64: 4, 128>}, {pipeline_mode = #tpu.pipeline_mode<synchronous>, transform_indices = @transform_2, window_bounds = array<i64: 1, 128>}, {transform_indices = @transform_3, window_bounds = array<i64: 128, 128>}]} {
    %c0 = arith.constant 0 : index
    %c0_0 = arith.constant 0 : index
    %0 = vector.load %arg1[%c0, %c0_0] : memref<128x4xf32, #tpu.memory_space<vmem>>, vector<128x4xf32>
    %1 = arith.truncf %0 : vector<128x4xf32> to vector<128x4xbf16>
    %c0_1 = arith.constant 0 : index
    %c0_2 = arith.constant 0 : index
    %2 = vector.load %arg2[%c0_1, %c0_2] : memref<4x128xbf16, #tpu.memory_space<vmem>>, vector<4x128xbf16>
    %cst = arith.constant dense<0.000000e+00> : vector<128x128xf32>
    %3 = tpu.matmul %1, %2, %cst {dimension_numbers = #tpu.dot_dimension_numbers<[1], [0], [0], [1], [0, 0, 1, 1], [], []>} : vector<128x4xbf16>, vector<4x128xbf16>, vector<128x128xf32> -> vector<128x128xf32>
    %c0_3 = arith.constant 0 : index
    %c0_4 = arith.constant 0 : index
    %4 = vector.load %arg3[%c0_3, %c0_4] : memref<1x128xf32, #tpu.memory_space<vmem>>, vector<1x128xf32>
    %5 = vector.broadcast %4 : vector<1x128xf32> to vector<128x128xf32>
    %6 = arith.addf %3, %5 : vector<128x128xf32>
    %7 = arith.truncf %6 : vector<128x128xf32> to vector<128x128xbf16>
    %c0_5 = arith.constant 0 : index
    %c0_6 = arith.constant 0 : index
    %8 = vector.load %arg4[%c0_5, %c0_6] : memref<128x128xbf16, #tpu.memory_space<vmem>>, vector<128x128xbf16>
    tpu.vector_store %arg4[%c0_5, %c0_6], %7 {strides = array<i32>} : memref<128x128xbf16, #tpu.memory_space<vmem>>, vector<128x128xbf16>,
    return
  }
  func.func @transform_0(%arg0: i32) -> (i32, i32) {
    %c0_i32 = arith.constant 0 : i32
    %c0_i32_0 = arith.constant 0 : i32
    return %arg0, %c0_i32 : i32, i32
  }
  func.func @transform_1(%arg0: i32) -> (i32, i32) {
    %c0_i32 = arith.constant 0 : i32
    %c0_i32_0 = arith.constant 0 : i32
    %c0_i32_1 = arith.constant 0 : i32
    return %c0_i32, %c0_i32_0 : i32, i32
  }
  func.func @transform_2(%arg0: i32) -> (i32, i32) {
    %c0_i32 = arith.constant 0 : i32
    %c0_i32_0 = arith.constant 0 : i32
    %c0_i32_1 = arith.constant 0 : i32
    return %c0_i32, %c0_i32_0 : i32, i32
  }
  func.func @transform_3(%arg0: i32) -> (i32, i32) {
    %c0_i32 = arith.constant 0 : i32
    %c0_i32_0 = arith.constant 0 : i32
    return %arg0, %c0_i32 : i32, i32
  }
}

</mosaic_0001>

<llo_original>
// kernel: tpu_custom_call.1
$region0: #{tpu_custom_call.1}
  #allocation0 [shape = 'u32[]', space=smem, size = 0x4, offset = 0x4, fixed_abs, tag = 'smem constant byte address 0x4 - core index']
  #allocation1 [shape = 'u32[144,128]{1,0:T(1,128)}', space=vmem, size = 0x12000, scoped, tag = 'internal scratch']
  %s0 = inlined_call_operand.vmem [shape: f32[128,4], index: 0, kind: input, shape index: {}]
  %s1 = inlined_call_operand.vmem [shape: bf16[4,128], index: 1, kind: input, shape index: {}]
  %s2 = inlined_call_operand.vmem [shape: f32[1,128], index: 2, kind: input, shape index: {}]
  %s3 = inlined_call_operand.hbm [shape: bf16[128,128], index: 3, kind: output, shape index: {}]
  %s4 = sld [smem:[#allocation0]]
  $region22: #{tpu_custom_call.1} parent=0
    _
  %s6 = ssub.s32 1, %s4
  %s7 = scalar_select 0, %s6, %s4
  $region1: #{tpu_custom_call.1} parent=0
    #allocation2 [shape = 'u8[32768]{0}', space=vmem, size = 0x8000, scoped, tag = 'output window, operand 0, single buffered']
    #allocation3 [shape = 's32[1]{0}', space=sflag, size = 0x4, scoped, tag = 'scoped memory for tpu_custom_call.1']
    %8 = vsyncpa [#allocation3], 0
    // Predicated region
    $region2: #{tpu_custom_call.1} parent=1 // pred_check
      _
    $region3: #{tpu_custom_call.1} parent=1 // pred_check_branch
      %10 = sbr.rel (0) target = $region5
    $region4: #{tpu_custom_call.1} parent=1 // pred_region
      _
    $region5: #{tpu_custom_call.1} parent=1 // pred_fallthru
      _
    // Predicated region
    $region6: #{tpu_custom_call.1} parent=1 // pred_check
      _
    $region7: #{tpu_custom_call.1} parent=1 // pred_check_branch
      %12 = sbr.rel (0) target = $region9
    $region8: #{tpu_custom_call.1} parent=1 // pred_region
      _
    $region9: #{tpu_custom_call.1} parent=1 // pred_fallthru
      _
    // Predicated region
    $region10: #{tpu_custom_call.1} parent=1 // pred_check
      _
    $region11: #{tpu_custom_call.1} parent=1 // pred_check_branch
      %14 = sbr.rel (0) target = $region13
    $region12: #{tpu_custom_call.1} parent=1 // pred_region
      _
    $region13: #{tpu_custom_call.1} parent=1 // pred_fallthru
      _
    %v16 = vld [vmem:[%s0] sm:$0xff]
    %v17 = vld [vmem:[%s0 + $0x8] sm:$0xff]
    %v18 = vld [vmem:[%s0 + $0x10] sm:$0xff]
    %v19 = vld [vmem:[%s0 + $0x18] sm:$0xff]
    %v20 = vld [vmem:[%s0 + $0x20] sm:$0xff]
    %v21 = vld [vmem:[%s0 + $0x28] sm:$0xff]
    %v22 = vld [vmem:[%s0 + $0x30] sm:$0xff]
    %v23 = vld [vmem:[%s0 + $0x38] sm:$0xff]
    %v24 = vld [vmem:[%s0 + $0x40] sm:$0xff]
    %v25 = vld [vmem:[%s0 + $0x48] sm:$0xff]
    %v26 = vld [vmem:[%s0 + $0x50] sm:$0xff]
    %v27 = vld [vmem:[%s0 + $0x58] sm:$0xff]
    %v28 = vld [vmem:[%s0 + $0x60] sm:$0xff]
    %v29 = vld [vmem:[%s0 + $0x68] sm:$0xff]
    %v30 = vld [vmem:[%s0 + $0x70] sm:$0xff]
    %v31 = vld [vmem:[%s0 + $0x78] sm:$0xff]
    %v32 = vpack.c.bf16 %v17, %v16
    %v33 = vpack.c.bf16 %v19, %v18
    %v34 = vpack.c.bf16 %v21, %v20
    %v35 = vpack.c.bf16 %v23, %v22
    %v36 = vpack.c.bf16 %v25, %v24
    %v37 = vpack.c.bf16 %v27, %v26
    %v38 = vpack.c.bf16 %v29, %v28
    %v39 = vpack.c.bf16 %v31, %v30
    %v40 = vld [vmem:[%s1] sm:$0x3]
    %v41 = vld [vmem:[%s2] sm:$0x1]
    %v43 = vlaneseq
    %v44 = vshrl.u32 %v43, 7
    %v45 = vsub.s32 0, %v44
    %v46 = vrot.slane %v41, %v45
    %vm48 = vcmask 31744
    %v50 = vsel %vm48, %v32, 0
    %v53 = vsel %vm48, %v33, 0
    %v56 = vsel %vm48, %v34, 0
    %v59 = vsel %vm48, %v35, 0
    %v62 = vsel %vm48, %v36, 0
    %v65 = vsel %vm48, %v37, 0
    %v68 = vsel %vm48, %v38, 0
    %v71 = vsel %vm48, %v39, 0
    %vm73 = vcmask 1041408
    %v75 = vsel %vm73, %v40, 0
    %77 = vmatprep.subr.bf16.mxu0 0
    %78 = vmatpush1.bf16.msra.mxu0 0
    %79 = vmatprep.subr.bf16.mxu0 0
    %80 = vmatpush1.bf16.msra.mxu0 0
    %81 = vmatprep.subr.bf16.mxu0 0
    %82 = vmatpush1.bf16.msra.mxu0 0
    %83 = vmatprep.subr.bf16.mxu0 0
    %84 = vmatpush1.bf16.msra.mxu0 0
    %85 = vmatprep.subr.bf16.mxu0 0
    %86 = vmatpush1.bf16.msra.mxu0 0
    %87 = vmatprep.subr.bf16.mxu0 0
    %88 = vmatpush1.bf16.msra.mxu0 0
    %89 = vmatprep.subr.bf16.mxu0 0
    %90 = vmatpush1.bf16.msra.mxu0 0
    %91 = vmatprep.subr.bf16.mxu0 0
    %92 = vmatpush1.bf16.msra.mxu0 %v75
    %93 = vmatprep.subr.bf16.mxu0 0
    %94 = vmatpush2.bf16.msra.mxu0 0
    %95 = vmatprep.subr.bf16.mxu0 0
    %96 = vmatpush2.bf16.msra.mxu0 0
    %97 = vmatprep.subr.bf16.mxu0 0
    %98 = vmatpush2.bf16.msra.mxu0 0
    %99 = vmatprep.subr.bf16.mxu0 0
    %100 = vmatpush2.bf16.msra.mxu0 0
    %101 = vmatprep.subr.bf16.mxu0 0
    %102 = vmatpush2.bf16.msra.mxu0 0
    %103 = vmatprep.subr.bf16.mxu0 0
    %104 = vmatpush2.bf16.msra.mxu0 0
    %105 = vmatprep.subr.bf16.mxu0 0
    %106 = vmatpush2.bf16.msra.mxu0 0
    %107 = vmatprep.subr.bf16.mxu0 0
    %108 = vmatpush2.bf16.msra.mxu0 0
    %109 = vmatprep.mubr.bf16.mxu0 0
    %110 = vmatmul.mubr.bf16.gmra.mxu0 %v50
    %v111 = vpop.f32.mrf.mxu0
    %v112 = vadd.f32 %v46, %v111
    %v113 = vpop.f32.mrf.mxu0
    %v114 = vpop.f32.mrf.mxu0
    %v115 = vadd.f32 %v46, %v114
    %v116 = vpop.f32.mrf.mxu0
    %117 = vmatprep.mubr.bf16.mxu0 0
    %118 = vmatmul.mubr.bf16.gmra.mxu0 %v53
    %v119 = vpop.f32.mrf.mxu0
    %v120 = vadd.f32 %v46, %v119
    %v121 = vpop.f32.mrf.mxu0
    %v122 = vpop.f32.mrf.mxu0
    %v123 = vadd.f32 %v46, %v122
    %v124 = vpop.f32.mrf.mxu0
    %125 = vmatprep.mubr.bf16.mxu0 0
    %126 = vmatmul.mubr.bf16.gmra.mxu0 %v56
    %v127 = vpop.f32.mrf.mxu0
    %v128 = vadd.f32 %v46, %v127
    %v129 = vpop.f32.mrf.mxu0
    %v130 = vpop.f32.mrf.mxu0
    %v131 = vadd.f32 %v46, %v130
    %v132 = vpop.f32.mrf.mxu0
    %133 = vmatprep.mubr.bf16.mxu0 0
    %134 = vmatmul.mubr.bf16.gmra.mxu0 %v59
    %v135 = vpop.f32.mrf.mxu0
    %v136 = vadd.f32 %v46, %v135
    %v137 = vpop.f32.mrf.mxu0
    %v138 = vpop.f32.mrf.mxu0
    %v139 = vadd.f32 %v46, %v138
    %v140 = vpop.f32.mrf.mxu0
    %141 = vmatprep.mubr.bf16.mxu0 0
    %142 = vmatmul.mubr.bf16.gmra.mxu0 %v62
    %v143 = vpop.f32.mrf.mxu0
    %v144 = vadd.f32 %v46, %v143
    %v145 = vpop.f32.mrf.mxu0
    %v146 = vpop.f32.mrf.mxu0
    %v147 = vadd.f32 %v46, %v146
    %v148 = vpop.f32.mrf.mxu0
    %149 = vmatprep.mubr.bf16.mxu0 0
    %150 = vmatmul.mubr.bf16.gmra.mxu0 %v65
    %v151 = vpop.f32.mrf.mxu0
    %v152 = vadd.f32 %v46, %v151
    %v153 = vpop.f32.mrf.mxu0
    %v154 = vpop.f32.mrf.mxu0
    %v155 = vadd.f32 %v46, %v154
    %v156 = vpop.f32.mrf.mxu0
    %157 = vmatprep.mubr.bf16.mxu0 0
    %158 = vmatmul.mubr.bf16.gmra.mxu0 %v68
    %v159 = vpop.f32.mrf.mxu0
    %v160 = vadd.f32 %v46, %v159
    %v161 = vpop.f32.mrf.mxu0
    %v162 = vpop.f32.mrf.mxu0
    %v163 = vadd.f32 %v46, %v162
    %v164 = vpop.f32.mrf.mxu0
    %165 = vmatprep.mubr.bf16.mxu0 0
    %166 = vmatmul.mubr.bf16.gmra.mxu0 %v71
    %v167 = vpop.f32.mrf.mxu0
    %v168 = vadd.f32 %v46, %v167
    %v169 = vpop.f32.mrf.mxu0
    %v170 = vpop.f32.mrf.mxu0
    %v171 = vadd.f32 %v46, %v170
    %v172 = vpop.f32.mrf.mxu0
    %173 = vdwg.mxu0
    %v174 = vpack.c.bf16 %v115, %v112
    %v175 = vpack.c.bf16 %v123, %v120
    %v176 = vpack.c.bf16 %v131, %v128
    %v177 = vpack.c.bf16 %v139, %v136
    %v178 = vpack.c.bf16 %v147, %v144
    %v179 = vpack.c.bf16 %v155, %v152
    %v180 = vpack.c.bf16 %v163, %v160
    %v181 = vpack.c.bf16 %v171, %v168
    %v190 = vunpack.c.l.b16 %v174
    %v191 = vunpack.c.h.b16 %v174
    %v192 = vunpack.c.l.b16 %v175
    %v193 = vunpack.c.h.b16 %v175
    %v194 = vunpack.c.l.b16 %v176
    %v195 = vunpack.c.h.b16 %v176
    %v196 = vunpack.c.l.b16 %v177
    %v197 = vunpack.c.h.b16 %v177
    %v198 = vunpack.c.l.b16 %v178
    %v199 = vunpack.c.h.b16 %v178
    %v200 = vunpack.c.l.b16 %v179
    %v201 = vunpack.c.h.b16 %v179
    %v202 = vunpack.c.l.b16 %v180
    %v203 = vunpack.c.h.b16 %v180
    %v204 = vunpack.c.l.b16 %v181
    %v205 = vunpack.c.h.b16 %v181
    %v206 = vpack.c.b16 %v190, %v190
    %v207 = vpack.c.b16 %v191, %v191
    %v208 = vpack.c.b16 %v192, %v192
    %v209 = vpack.c.b16 %v193, %v193
    %v210 = vpack.c.b16 %v194, %v194
    %v211 = vpack.c.b16 %v195, %v195
    %v212 = vpack.c.b16 %v196, %v196
    %v213 = vpack.c.b16 %v197, %v197
    %v214 = vpack.c.b16 %v198, %v198
    %v215 = vpack.c.b16 %v199, %v199
    %v216 = vpack.c.b16 %v200, %v200
    %v217 = vpack.c.b16 %v201, %v201
    %v218 = vpack.c.b16 %v202, %v202
    %v219 = vpack.c.b16 %v203, %v203
    %v220 = vpack.c.b16 %v204, %v204
    %v221 = vpack.c.b16 %v205, %v205
    %238 = vst [vmem:[#allocation2] sm:$0xf] %v206
    %239 = vst [vmem:[#allocation2 + $0x4] sm:$0xf] %v207
    %240 = vst [vmem:[#allocation2 + $0x8] sm:$0xf] %v208
    %241 = vst [vmem:[#allocation2 + $0xc] sm:$0xf] %v209
    %242 = vst [vmem:[#allocation2 + $0x10] sm:$0xf] %v210
    %243 = vst [vmem:[#allocation2 + $0x14] sm:$0xf] %v211
    %244 = vst [vmem:[#allocation2 + $0x18] sm:$0xf] %v212
    %245 = vst [vmem:[#allocation2 + $0x1c] sm:$0xf] %v213
    %246 = vst [vmem:[#allocation2 + $0x20] sm:$0xf] %v214
    %247 = vst [vmem:[#allocation2 + $0x24] sm:$0xf] %v215
    %248 = vst [vmem:[#allocation2 + $0x28] sm:$0xf] %v216
    %249 = vst [vmem:[#allocation2 + $0x2c] sm:$0xf] %v217
    %250 = vst [vmem:[#allocation2 + $0x30] sm:$0xf] %v218
    %251 = vst [vmem:[#allocation2 + $0x34] sm:$0xf] %v219
    %252 = vst [vmem:[#allocation2 + $0x38] sm:$0xf] %v220
    %253 = vst [vmem:[#allocation2 + $0x3c] sm:$0xf] %v221
    // Predicated region
    $region14: #{tpu_custom_call.1} parent=1 // pred_check
      _
    $region15: #{tpu_custom_call.1} parent=1 // pred_check_branch
      %255 = sbr.rel (0) target = $region17
    $region16: #{tpu_custom_call.1} parent=1 // pred_region
      %s257 = ssub.s32 1024, 1024
      %258 = vsyncadd [#allocation3], %s257
      %s259 = sshll.u32 [#allocation2], 4
      %s260 = int_to_ptr.vmem [resolvable:$true] %s259
      %265 = dma.vmem_to_hbm [thread:$0]  %s260, 1024, %s3, [#allocation3], 64, 64, 4
    $region17: #{tpu_custom_call.1} parent=1 // pred_fallthru
      _
    // Predicated region
    $region18: #{tpu_custom_call.1} parent=1 // pred_check
      _
    $region19: #{tpu_custom_call.1} parent=1 // pred_check_branch
      %267 = sbr.rel (0) target = $region21
    $region20: #{tpu_custom_call.1} parent=1 // pred_region
      %268 = dma.done [#allocation3], 1024
    $region21: #{tpu_custom_call.1} parent=1 // pred_fallthru
      _
    %269 = vsyncpa [#allocation3], 1

</llo_original>
